<compile_context>
chip_gen: v7x
topology: tpu7x:2x2x1
jax: 0.10.0
libtpu: 0.0.40
codegen_flags: <defaults>
</compile_context>

<pallas_src>
import jax
import jax.numpy as jnp
from jax.experimental import pallas as pl
from jax.experimental.pallas import tpu as pltpu


def _round_up(x, m):
    return (x + m - 1) // m * m


def _tpu_vmem_bytes():
    """Physical per-core VMEM; conservative default if the query is unavailable."""
    try:
        info = pltpu.get_tpu_info()
        return int(getattr(info, "vmem_capacity_bytes", 64 << 20))
    except Exception:
        return 64 << 20


def _choose_tiles(n_rows, n_cols, itemsize, vmem_bytes):
    """Generation-aware tile sizes + explicit scoped-VMEM limit."""
    # Leave headroom below physical VMEM (v5e/v6e: ~96 MiB of 128; v7x: 48 MiB of 64).
    vmem_limit = min(vmem_bytes * 3 // 4, 96 << 20)
    # Budget per rank input buffer (double-buffered by the BlockSpec pipeline).
    per_buffer = max(vmem_limit // 4, 1 << 20)

    # Column tile: lane-dense multiple of 128; keep >= 2 column blocks when the
    # matrix is wide enough so the "parallel" axis can shard across TensorCores.
    padded_c = _round_up(n_cols, 128)
    tile_c = min(padded_c, 512)
    if tile_c == padded_c and padded_c >= 256:
        tile_c = _round_up(padded_c // 2, 128)

    # Row tile: as deep as the per-buffer budget allows (capped at 1024 rows),
    # multiple of 32 so f32/bf16/int8 sublane packing all stay native.
    max_rows = max(32, per_buffer // (itemsize * tile_c))
    tile_r = max(32, min(1024, (max_rows // 32) * 32))
    tile_r = min(tile_r, _round_up(n_rows, 8))
    tile_r = max(8, (tile_r // 8) * 8)
    return tile_r, tile_c, int(vmem_limit)


def _make_colsum_kernel(tile_r, tile_c, n_rows, num_row_tiles):
    """Kernel computing column sums of `rank`, streamed over row tiles."""
    rows_in_last = n_rows - (num_row_tiles - 1) * tile_r   # static
    needs_mask = rows_in_last != tile_r
    groups = tile_r // 8

    def kernel(rank_ref, colsum_ref, acc_ref):
        i = pl.program_id(1)   # row-tile (reduction) step; axis 0 = parallel column axis

        @pl.when(i == 0)
        def _init():
            acc_ref[...] = jnp.zeros_like(acc_ref)

        def _accumulate(valid_rows):
            # Upcast per-tile on the VPU; f32 accumulation (exact while colsum < 2^24).
            tile = rank_ref[...].astype(jnp.float32)            # (tile_r, tile_c)
            if valid_rows is not None:
                # Mask the ragged tail rows (beyond n_rows the block holds garbage).
                rows = jax.lax.broadcasted_iota(jnp.int32, tile.shape, 0)
                tile = jnp.where(rows < valid_rows, tile, 0.0)
            # Strided sublane adds (pure VPU, no MXU push): fold tile_r rows into 8.
            acc_ref[...] += tile.reshape(groups, 8, tile_c).sum(axis=0)

        if needs_mask:
            @pl.when(i < num_row_tiles - 1)
            def _body():
                _accumulate(None)

            @pl.when(i == num_row_tiles - 1)
            def _tail():
                _accumulate(rows_in_last)
        else:
            _accumulate(None)

        @pl.when(i == num_row_tiles - 1)
        def _finalize():
            colsum_ref[...] = jnp.sum(acc_ref[...], axis=0, keepdims=True)  # (1, tile_c)

    return kernel


def partial_nll(theta, rank, censored, *, tile_rows=None, tile_cols=None):
    theta = jnp.asarray(theta)
    censored = jnp.asarray(censored)
    rank = jnp.asarray(rank)            # keep the caller's (possibly narrow) dtype
    if rank.dtype == jnp.bool_:
        rank = rank.astype(jnp.int8)    # keep the 1-byte HBM stream; bool blocks are awkward
    n_rows, n_cols = rank.shape
    itemsize = rank.dtype.itemsize

    auto_r, auto_c, vmem_limit = _choose_tiles(n_rows, n_cols, itemsize, _tpu_vmem_bytes())
    tile_r = auto_r if tile_rows is None else max(8, (int(tile_rows) // 8) * 8)
    tile_c = auto_c if tile_cols is None else max(128, (int(tile_cols) // 128) * 128)

    num_row_tiles = -(-n_rows // tile_r)
    num_col_tiles = -(-n_cols // tile_c)

    kernel = _make_colsum_kernel(tile_r, tile_c, n_rows, num_row_tiles)

    cost = pl.CostEstimate(
        # One VPU add per streamed element (no MXU in this kernel).
        flops=num_row_tiles * tile_r * num_col_tiles * tile_c,
        transcendentals=0,
        bytes_accessed=rank.size * itemsize + 4 * n_cols,
    )

    colsum = pl.pallas_call(
        kernel,
        out_shape=jax.ShapeDtypeStruct((1, n_cols), jnp.float32),
        grid_spec=pltpu.PrefetchScalarGridSpec(
            num_scalar_prefetch=0,
            grid=(num_col_tiles, num_row_tiles),
            in_specs=[
                # NOTE: pipeline_mode=pl.Buffered(3) is a marginal (<2%) option once
                # vmem_limit is explicit; kept at the default double-buffering.
                pl.BlockSpec((tile_r, tile_c), lambda j, i: (i, j)),   # rank tile
            ],
            out_specs=pl.BlockSpec((1, tile_c), lambda j, i: (0, j)),  # lane-dense colsum
            scratch_shapes=[pltpu.VMEM((8, tile_c), jnp.float32)],
        ),
        compiler_params=pltpu.CompilerParams(
            dimension_semantics=("parallel", "arbitrary"),
            vmem_limit_bytes=vmem_limit,
        ),
        cost_estimate=cost,
    )(rank)

    # O(N) epilogue in plain JAX (fuses; negligible vs. the O(N^2) rank stream).
    # Keeps the original formula (log(exp(theta)*colsum)) and the PyTorch broadcast
    # quirk: sum(diff (N,) * observed (N,1)) == sum(diff) * num_observed, with the
    # * / num_observed round trip so num_observed == 0 still yields NaN.
    theta_v = theta.astype(jnp.float32).reshape(-1)
    censored_v = censored.astype(jnp.float32).reshape(-1)
    observed = 1.0 - censored_v
    num_observed = jnp.sum(observed)
    row_sum = jnp.exp(theta_v) * colsum.reshape(-1)
    diff = theta_v - jnp.log(row_sum)
    total = jnp.sum(diff) * num_observed
    # TODO(synk): the PyTorch module's host-side NaN diagnostic print loop has no
    # in-kernel equivalent; the NaN loss value itself is still produced identically.
    return -(total / num_observed)


if __name__ == "__main__":
    key = jax.random.PRNGKey(0)
    k1, k2, k3 = jax.random.split(key, 3)
    N = 256  # small batch; tile_rows=96 / tile_cols=128 exercise masking + 2-D grid

    theta = jax.random.normal(k1, (N, 1), dtype=jnp.float32)
    # 0/1 risk-set indicator matrix kept in bf16 (exact for 0/1, halves HBM bytes);
    # ensure every column sum > 0 so log() is finite.
    rank = (jax.random.uniform(k2, (N, N)) > 0.5)
    rank = rank.at[jnp.arange(N), jnp.arange(N)].set(True)
    rank = rank.astype(jnp.bfloat16)
    # 0/1 censoring indicator; ensure at least one observed event.
    censored = (jax.random.uniform(k3, (N, 1)) > 0.5).astype(jnp.float32)
    censored = censored.at[0, 0].set(0.0)

    # grid = (2 col tiles, 3 row tiles); last row tile has 64 valid rows -> masked path.
    loss = partial_nll(theta, rank, censored, tile_rows=96, tile_cols=128)
    loss = jax.block_until_ready(loss)

    # Pure-JAX reference mirroring the PyTorch code (incl. its broadcasting quirk).
    rank_f = rank.astype(jnp.float32)
    exp_theta = jnp.exp(theta)
    observed = 1.0 - censored
    num_observed = jnp.sum(observed)
    score = rank_f.T * exp_theta
    diff = theta.reshape(-1) - jnp.log(jnp.sum(score, axis=1))      # (N,)
    ref = -(jnp.sum(diff[None, :] * observed) / num_observed)

    assert jnp.allclose(loss, ref, rtol=1e-5, atol=1e-5), (loss, ref)
    print("KERNEL_OK")
</pallas_src>

<mosaic_0001>
module attributes {stable_mosaic.version = 11 : i64} {
  func.func @kernel(%arg0: i32, %arg1: i32, %arg2: memref<96x128xbf16, #tpu.memory_space<vmem>>, %arg3: memref<1x128xf32, #tpu.memory_space<vmem>>, %arg4: memref<8x128xf32, #tpu.memory_space<vmem>>) attributes {dimension_semantics = [#tpu.dimension_semantics<parallel>, #tpu.dimension_semantics<arbitrary>], iteration_bounds = array<i64: 2, 3>, scalar_prefetch = 0 : i64, scratch_operands = 1 : i64, tpu.core_type = #tpu.core_type<tc>, window_params = [{transform_indices = @transform_0, window_bounds = array<i64: 96, 128>}, {transform_indices = @transform_1, window_bounds = array<i64: 1, 128>}]} {
    %c0_i32 = arith.constant 0 : i32
    %0 = arith.cmpi eq, %arg1, %c0_i32 : i32
    %1 = arith.extui %0 : i1 to i32
    %c0_i32_0 = arith.constant 0 : i32
    %2 = arith.cmpi ne, %1, %c0_i32_0 : i32
    scf.if %2 {
      %cst = arith.constant 0.000000e+00 : f32
      %12 = vector.broadcast %cst : f32 to vector<8x128xf32>
      %c0 = arith.constant 0 : index
      %c0_6 = arith.constant 0 : index
      %13 = vector.load %arg4[%c0, %c0_6] : memref<8x128xf32, #tpu.memory_space<vmem>>, vector<8x128xf32>
      tpu.vector_store %arg4[%c0, %c0_6], %12 {strides = array<i32>} : memref<8x128xf32, #tpu.memory_space<vmem>>, vector<8x128xf32>,
    } else {
    }
    %c2_i32 = arith.constant 2 : i32
    %3 = arith.cmpi slt, %arg1, %c2_i32 : i32
    %4 = arith.extui %3 : i1 to i32
    %c0_i32_1 = arith.constant 0 : i32
    %5 = arith.cmpi ne, %4, %c0_i32_1 : i32
    scf.if %5 {
      %c0 = arith.constant 0 : index
      %c0_6 = arith.constant 0 : index
      %12 = vector.load %arg2[%c0, %c0_6] : memref<96x128xbf16, #tpu.memory_space<vmem>>, vector<96x128xbf16>
      %13 = arith.extf %12 : vector<96x128xbf16> to vector<96x128xf32>
      %c0_7 = arith.constant 0 : index
      %c0_8 = arith.constant 0 : index
      %14 = vector.load %arg4[%c0_7, %c0_8] : memref<8x128xf32, #tpu.memory_space<vmem>>, vector<8x128xf32>
      %15 = vector.shape_cast %13 : vector<96x128xf32> to vector<12x8x128xf32>
      %cst = arith.constant dense<0.000000e+00> : vector<8x128xf32>
      %16 = vector.multi_reduction <add>, %15, %cst [0] : vector<12x8x128xf32> to vector<8x128xf32>
      %17 = arith.addf %14, %16 : vector<8x128xf32>
      %c0_9 = arith.constant 0 : index
      %c0_10 = arith.constant 0 : index
      %18 = vector.load %arg4[%c0_9, %c0_10] : memref<8x128xf32, #tpu.memory_space<vmem>>, vector<8x128xf32>
      tpu.vector_store %arg4[%c0_9, %c0_10], %17 {strides = array<i32>} : memref<8x128xf32, #tpu.memory_space<vmem>>, vector<8x128xf32>,
    } else {
    }
    %c2_i32_2 = arith.constant 2 : i32
    %6 = arith.cmpi eq, %arg1, %c2_i32_2 : i32
    %7 = arith.extui %6 : i1 to i32
    %c0_i32_3 = arith.constant 0 : i32
    %8 = arith.cmpi ne, %7, %c0_i32_3 : i32
    scf.if %8 {
      %c0 = arith.constant 0 : index
      %c0_6 = arith.constant 0 : index
      %12 = vector.load %arg2[%c0, %c0_6] : memref<96x128xbf16, #tpu.memory_space<vmem>>, vector<96x128xbf16>
      %13 = arith.extf %12 : vector<96x128xbf16> to vector<96x128xf32>
      %14 = tpu.iota {dimensions = array<i32: 0>} : vector<96x128xi32>
      %c64_i32 = arith.constant 64 : i32
      %15 = vector.broadcast %c64_i32 : i32 to vector<96x128xi32>
      %16 = arith.cmpi slt, %14, %15 : vector<96x128xi32>
      %cst = arith.constant 0.000000e+00 : f32
      %17 = vector.broadcast %cst : f32 to vector<96x128xf32>
      %18 = arith.select %16, %13, %17 : vector<96x128xi1>, vector<96x128xf32>
      %c0_7 = arith.constant 0 : index
      %c0_8 = arith.constant 0 : index
      %19 = vector.load %arg4[%c0_7, %c0_8] : memref<8x128xf32, #tpu.memory_space<vmem>>, vector<8x128xf32>
      %20 = vector.shape_cast %18 : vector<96x128xf32> to vector<12x8x128xf32>
      %cst_9 = arith.constant dense<0.000000e+00> : vector<8x128xf32>
      %21 = vector.multi_reduction <add>, %20, %cst_9 [0] : vector<12x8x128xf32> to vector<8x128xf32>
      %22 = arith.addf %19, %21 : vector<8x128xf32>
      %c0_10 = arith.constant 0 : index
      %c0_11 = arith.constant 0 : index
      %23 = vector.load %arg4[%c0_10, %c0_11] : memref<8x128xf32, #tpu.memory_space<vmem>>, vector<8x128xf32>
      tpu.vector_store %arg4[%c0_10, %c0_11], %22 {strides = array<i32>} : memref<8x128xf32, #tpu.memory_space<vmem>>, vector<8x128xf32>,
    } else {
    }
    %c2_i32_4 = arith.constant 2 : i32
    %9 = arith.cmpi eq, %arg1, %c2_i32_4 : i32
    %10 = arith.extui %9 : i1 to i32
    %c0_i32_5 = arith.constant 0 : i32
    %11 = arith.cmpi ne, %10, %c0_i32_5 : i32
    scf.if %11 {
      %c0 = arith.constant 0 : index
      %c0_6 = arith.constant 0 : index
      %12 = vector.load %arg4[%c0, %c0_6] : memref<8x128xf32, #tpu.memory_space<vmem>>, vector<8x128xf32>
      %cst = arith.constant dense<0.000000e+00> : vector<128xf32>
      %13 = vector.multi_reduction <add>, %12, %cst [0] : vector<8x128xf32> to vector<128xf32>
      %14 = vector.shape_cast %13 : vector<128xf32> to vector<1x128xf32>
      %c0_7 = arith.constant 0 : index
      %c0_8 = arith.constant 0 : index
      %15 = vector.load %arg3[%c0_7, %c0_8] : memref<1x128xf32, #tpu.memory_space<vmem>>, vector<1x128xf32>
      tpu.vector_store %arg3[%c0_7, %c0_8], %14 {strides = array<i32>} : memref<1x128xf32, #tpu.memory_space<vmem>>, vector<1x128xf32>,
    } else {
    }
    return
  }
  func.func @transform_0(%arg0: i32, %arg1: i32) -> (i32, i32) {
    %c0_i32 = arith.constant 0 : i32
    return %arg1, %arg0 : i32, i32
  }
  func.func @transform_1(%arg0: i32, %arg1: i32) -> (i32, i32) {
    %c0_i32 = arith.constant 0 : i32
    %c0_i32_0 = arith.constant 0 : i32
    return %c0_i32, %arg0 : i32, i32
  }
}

</mosaic_0001>

<llo_original>
// kernel: tpu_custom_call.1
$region0: #{tpu_custom_call.1}
  #allocation0 [shape = 'u32[]', space=smem, size = 0x4, offset = 0x4, fixed_abs, tag = 'smem constant byte address 0x4 - core index']
  #allocation1 [shape = 'u32[144,128]{1,0:T(1,128)}', space=vmem, size = 0x12000, scoped, tag = 'internal scratch']
  #allocation2 [shape = 'f32[8,128]{1,0:T(8,128)}', space=vmem, size = 0x1000, scoped, tag = 'scratch operand']
  %s0 = inlined_call_operand.hbm [shape: bf16[256,256], index: 0, kind: input, shape index: {}]
  %s1 = inlined_call_operand.hbm [shape: f32[1,256], index: 1, kind: output, shape index: {}]
  %s2 = sld [smem:[#allocation0]]
  $region53: #{tpu_custom_call.1} parent=0
    _
  %s4 = ssub.s32 1, %s2
  %s5 = scalar_select 0, %s4, %s2
  $region1: #{tpu_custom_call.1} parent=0
    #allocation3 [shape = 'u8[49152]{0}', space=vmem, size = 0xc000, scoped, tag = 'input window, operand 0']
    #allocation4 [shape = 's32[2]{0}', space=sflag, size = 0x8, scoped, tag = 'scoped memory for tpu_custom_call.1']
    #allocation5 [shape = 's32[2]{0}', space=sflag, size = 0x8, scoped, tag = 'scoped memory for tpu_custom_call.1']
    #allocation6 [shape = 'u8[1024]{0}', space=vmem, size = 0x400, scoped, tag = 'output window, operand 0']
    %6 = vsyncpa [#allocation4], 0
    %s7 = scalar_lea.sflag [#allocation4], 1
    %8 = vsyncpa %s7, 0
    %9 = vsyncpa [#allocation5], 0
    %s10 = scalar_lea.sflag [#allocation5], 1
    %11 = vsyncpa %s10, 0
    loop: start=0, step=1, limit=8
    $region2: #{tpu_custom_call.1} parent=1 // loop_pre_header
      _
    $region3: #{tpu_custom_call.1} parent=1 // loop_header
      %s13 = sphi 0, %s17
      %p14 = scmp.ge.s32.totalorder %s13, 8
      %s20 = sphi 0, %s32
      %s21 = sphi 0, %s28
      %s22 = sphi 0, %s20
      %s23 = sphi 0, %s21
      %s24 = sphi 0, %s22
      %s25 = sphi 0, %s23
      %s37 = sphi 0, %s39
      %s40 = sphi 0, %s37
      %s41 = sphi 0, %s40
      %s57 = sphi 0, %s41
      %s63 = sphi 0, %s65
      %s66 = sphi 0, %s63
      %s67 = sphi 0, %s66
      %s83 = sphi 0, %s67
    $region4: #{tpu_custom_call.1} parent=1 // loop_header_branch
      %16 = sbr.rel (%p14) target = $region8
    $region5: #{tpu_custom_call.1} parent=1 // loop_body
      %s18 = ssub.s32 %s13, 1
      %s19 = ssub.s32 %s13, 2
      %s26 = sadd.s32 1, %s21
      %p27 = scmp.ge.s32.totalorder %s26, 3
      %s28 = scalar_select %p27, 0, %s26
      %s29 = sadd.s32 1, %s20
      %s30 = scalar_select %p27, %s29, %s20
      %p31 = scmp.ge.s32.totalorder %s30, 2
      %s32 = scalar_select %p31, 0, %s30
      %s33 = ssub.s32 %s21, %s28
      %s34 = ssub.s32 %s20, %s32
      %s35 = sor.u32 %s33, %s34
      %p36 = scmp.eq.s32.totalorder %s35, 0
      %s38 = sadd.s32 %s37, 1
      %s39 = scalar_select %p36, %s37, %s38
      %p42 = pneg %p36
      %p43 = scmp.eq.s32.totalorder %s13, 5
      %p44 = por %p42, %p43
      %p45 = scmp.ne.s32.totalorder %s37, %s40
      %p46 = scmp.eq.s32.totalorder %s13, 0
      %p47 = por %p45, %p46
      %p48 = scmp.ne.s32.totalorder %s37, %s40
      %p49 = scmp.eq.s32.totalorder %s18, 5
      %p50 = por %p48, %p49
      %p51 = scmp.ne.s32.totalorder %s40, %s41
      %p52 = scmp.eq.s32.totalorder %s18, 0
      %p53 = por %p51, %p52
      %p54 = scmp.ne.s32.totalorder %s40, %s41
      %p55 = scmp.eq.s32.totalorder %s19, 5
      %p56 = por %p54, %p55
      %p58 = scmp.ne.s32.totalorder %s41, %s57
      %p59 = scmp.eq.s32.totalorder %s19, 0
      %p60 = por %p58, %p59
      %s61 = ssub.s32 %s20, %s32
      %p62 = scmp.eq.s32.totalorder %s61, 0
      %s64 = sadd.s32 %s63, 1
      %s65 = scalar_select %p62, %s63, %s64
      %p68 = pneg %p62
      %p69 = scmp.eq.s32.totalorder %s13, 5
      %p70 = por %p68, %p69
      %p71 = scmp.ne.s32.totalorder %s63, %s66
      %p72 = scmp.eq.s32.totalorder %s13, 0
      %p73 = por %p71, %p72
      %p74 = scmp.ne.s32.totalorder %s63, %s66
      %p75 = scmp.eq.s32.totalorder %s18, 5
      %p76 = por %p74, %p75
      %p77 = scmp.ne.s32.totalorder %s66, %s67
      %p78 = scmp.eq.s32.totalorder %s18, 0
      %p79 = por %p77, %p78
      %p80 = scmp.ne.s32.totalorder %s66, %s67
      %p81 = scmp.eq.s32.totalorder %s19, 5
      %p82 = por %p80, %p81
      %p84 = scmp.ne.s32.totalorder %s67, %s83
      %p85 = scmp.eq.s32.totalorder %s19, 0
      %p86 = por %p84, %p85
      %p87 = scmp.le.s32.totalorder 1, %s13
      %p88 = scmp.lt.s32.totalorder %s13, 7
      %p89 = pnand %p87, %p88
      %p90 = pneg %p89
      // Predicated region
      $region9: #{tpu_custom_call.1} parent=5 // pred_check
        _
      $region10: #{tpu_custom_call.1} parent=5 // pred_check_branch
        %92 = sbr.rel (%p89) target = $region12
      $region11: #{tpu_custom_call.1} parent=5 // pred_region
        %s93 = ssub.s32 %s13, 1
      $region12: #{tpu_custom_call.1} parent=5 // pred_fallthru
        _
      %p94 = scmp.lt.s32.totalorder %s13, 6
      // Predicated region
      $region13: #{tpu_custom_call.1} parent=5 // pred_check
        %p95 = pneg %p94
      $region14: #{tpu_custom_call.1} parent=5 // pred_check_branch
        %97 = sbr.rel (%p95) target = $region16
      $region15: #{tpu_custom_call.1} parent=5 // pred_region
        // Predicated region
        $region17: #{tpu_custom_call.1} parent=15 // pred_check
          %p98 = pneg %p47
        $region18: #{tpu_custom_call.1} parent=15 // pred_check_branch
          %100 = sbr.rel (%p98) target = $region20
        $region19: #{tpu_custom_call.1} parent=15 // pred_region
          %s101 = sand.u32 %s37, 1
          %s102 = scalar_lea.sflag [#allocation4], %s101
          %s103 = sand.u32 %s37, 1
          %s104 = smul.addr %s103, 48
          %s105 = scalar_lea.vmem [#allocation3], %s104
          %s106 = smul.u32 12, %s21
          %s107 = ssub.s32 32, %s106
          %p108 = scmp.lt.s32.totalorder %s107, 12
          %s109 = scalar_select %p108, %s107, 12
          %s110 = smul.u32 64, %s109
          %s112 = ssub.s32 768, %s110
          %113 = vsyncadd %s102, %s112
          %p114 = scmp.ne.s32.totalorder 0, %s110
          %s115 = smul.addr %s106, 2
          %s116 = sadd.s32 %s20, %s115
          %s117 = smul.addr %s116, 64
          %s118 = scalar_lea.hbm %s0, %s117
          %s119 = smul.u32 4, %s109
          %s120 = sshll.u32 %s105, 4
          %s121 = int_to_ptr.vmem [resolvable:$true] %s120
          %s122 = sshll.u32 %s119, 4
          %126 = dma.hbm_to_vmem [thread:$0]  (%p114), %s118, %s122, %s121, %s102, 128, 64, 4
        $region20: #{tpu_custom_call.1} parent=15 // pred_fallthru
          _
      $region16: #{tpu_custom_call.1} parent=5 // pred_fallthru
        _
      %p127 = scmp.le.s32.totalorder 1, %s13
      %p128 = scmp.lt.s32.totalorder %s13, 7
      %p129 = pnand %p127, %p128
      %p130 = pneg %p129
      // Predicated region
      $region21: #{tpu_custom_call.1} parent=5 // pred_check
        _
      $region22: #{tpu_custom_call.1} parent=5 // pred_check_branch
        %132 = sbr.rel (%p129) target = $region24
      $region23: #{tpu_custom_call.1} parent=5 // pred_region
        %s133 = ssub.s32 %s13, 1
        %s134 = sand.u32 %s40, 1
        %s135 = scalar_lea.sflag [#allocation4], %s134
        %s136 = sand.u32 %s40, 1
        %s137 = smul.addr %s136, 48
        %s138 = scalar_lea.vmem [#allocation3], %s137
        // Predicated region
        $region25: #{tpu_custom_call.1} parent=23 // pred_check
          %p139 = pneg %p53
        $region26: #{tpu_custom_call.1} parent=23 // pred_check_branch
          %141 = sbr.rel (%p139) target = $region28
        $region27: #{tpu_custom_call.1} parent=23 // pred_region
          %142 = dma.done %s135, 768
        $region28: #{tpu_custom_call.1} parent=23 // pred_fallthru
          _
        %s143 = sand.u32 %s40, 1
        %s144 = scalar_lea.sflag [#allocation4], %s143
        %s145 = sand.u32 %s40, 1
        %s146 = smul.addr %s145, 48
        %s147 = scalar_lea.vmem [#allocation3], %s146
        %p148 = pneg %p53
        %p149 = pneg %p50
        %p150 = pneg %p79
        %p151 = pneg %p76
        %s152 = sand.u32 %s66, 1
        %s153 = scalar_lea.sflag [#allocation5], %s152
        %s154 = sand.u32 %s66, 1
        %s155 = scalar_lea.vmem [#allocation6], %s154
        %s156 = smul.u32 12, %s23
        %s157 = ssub.s32 32, %s156
        %p158 = scmp.lt.s32.totalorder %s157, 12
        %s159 = scalar_select %p158, %s157, 12
        %s160 = smul.u32 64, %s159
        %p161 = scmp.eq.s32.totalorder %s23, 0
        // Predicated region
        $region29: #{tpu_custom_call.1} parent=23 // pred_check
          %p162 = pneg %p161
        $region30: #{tpu_custom_call.1} parent=23 // pred_check_branch
          %164 = sbr.rel (%p162) target = $region32
        $region31: #{tpu_custom_call.1} parent=23 // pred_region
          %165 = vst [vmem:[#allocation2] sm:$0xff] 0.0
        $region32: #{tpu_custom_call.1} parent=23 // pred_fallthru
          _
        %p166 = scmp.lt.s32.totalorder %s23, 2
        // Predicated region
        $region33: #{tpu_custom_call.1} parent=23 // pred_check
          %p167 = pneg %p166
        $region34: #{tpu_custom_call.1} parent=23 // pred_check_branch
          %169 = sbr.rel (%p167) target = $region36
        $region35: #{tpu_custom_call.1} parent=23 // pred_region
          %v170 = vld [vmem:[%s138] sm:$0xf]
          %v171 = vld [vmem:[%s138 + $0x4] sm:$0xf]
          %v172 = vld [vmem:[%s138 + $0x8] sm:$0xf]
          %v173 = vld [vmem:[%s138 + $0xc] sm:$0xf]
          %v174 = vld [vmem:[%s138 + $0x10] sm:$0xf]
          %v175 = vld [vmem:[%s138 + $0x14] sm:$0xf]
          %v176 = vld [vmem:[%s138 + $0x18] sm:$0xf]
          %v177 = vld [vmem:[%s138 + $0x1c] sm:$0xf]
          %v178 = vld [vmem:[%s138 + $0x20] sm:$0xf]
          %v179 = vld [vmem:[%s138 + $0x24] sm:$0xf]
          %v180 = vld [vmem:[%s138 + $0x28] sm:$0xf]
          %v181 = vld [vmem:[%s138 + $0x2c] sm:$0xf]
          %v182 = vunpack.c.l.bf16 %v170
          %v183 = vunpack.c.l.bf16 %v171
          %v184 = vunpack.c.l.bf16 %v172
          %v185 = vunpack.c.l.bf16 %v173
          %v186 = vunpack.c.l.bf16 %v174
          %v187 = vunpack.c.l.bf16 %v175
          %v188 = vunpack.c.l.bf16 %v176
          %v189 = vunpack.c.l.bf16 %v177
          %v190 = vunpack.c.l.bf16 %v178
          %v191 = vunpack.c.l.bf16 %v179
          %v192 = vunpack.c.l.bf16 %v180
          %v193 = vunpack.c.l.bf16 %v181
          %v194 = vld [vmem:[#allocation2] sm:$0xff]
          %v195 = vadd.f32 %v182, %v183
          %v196 = vadd.f32 %v195, %v184
          %v197 = vadd.f32 %v196, %v185
          %v198 = vadd.f32 %v197, %v186
          %v199 = vadd.f32 %v198, %v187
          %v200 = vadd.f32 %v199, %v188
          %v201 = vadd.f32 %v200, %v189
          %v202 = vadd.f32 %v201, %v190
          %v203 = vadd.f32 %v202, %v191
          %v204 = vadd.f32 %v203, %v192
          %v205 = vadd.f32 %v204, %v193
          %v206 = vadd.f32 %v194, %v205
          %207 = vst [vmem:[#allocation2] sm:$0xff] %v206
        $region36: #{tpu_custom_call.1} parent=23 // pred_fallthru
          _
        %p208 = scmp.eq.s32.totalorder %s23, 2
        // Predicated region
        $region37: #{tpu_custom_call.1} parent=23 // pred_check
          %p209 = pneg %p208
        $region38: #{tpu_custom_call.1} parent=23 // pred_check_branch
          %211 = sbr.rel (%p209) target = $region40
        $region39: #{tpu_custom_call.1} parent=23 // pred_region
          %v212 = vld [vmem:[%s138] sm:$0xf]
          %v213 = vld [vmem:[%s138 + $0x4] sm:$0xf]
          %v214 = vld [vmem:[%s138 + $0x8] sm:$0xf]
          %v215 = vld [vmem:[%s138 + $0xc] sm:$0xf]
          %v216 = vld [vmem:[%s138 + $0x10] sm:$0xf]
          %v217 = vld [vmem:[%s138 + $0x14] sm:$0xf]
          %v218 = vld [vmem:[%s138 + $0x18] sm:$0xf]
          %v219 = vld [vmem:[%s138 + $0x1c] sm:$0xf]
          %v220 = vld [vmem:[%s138 + $0x20] sm:$0xf]
          %v221 = vld [vmem:[%s138 + $0x24] sm:$0xf]
          %v222 = vld [vmem:[%s138 + $0x28] sm:$0xf]
          %v223 = vld [vmem:[%s138 + $0x2c] sm:$0xf]
          %v224 = vunpack.c.l.bf16 %v212
          %v225 = vunpack.c.l.bf16 %v213
          %v226 = vunpack.c.l.bf16 %v214
          %v227 = vunpack.c.l.bf16 %v215
          %v228 = vunpack.c.l.bf16 %v216
          %v229 = vunpack.c.l.bf16 %v217
          %v230 = vunpack.c.l.bf16 %v218
          %v231 = vunpack.c.l.bf16 %v219
          %v232 = vunpack.c.l.bf16 %v220
          %v233 = vunpack.c.l.bf16 %v221
          %v234 = vunpack.c.l.bf16 %v222
          %v235 = vunpack.c.l.bf16 %v223
          %v236 = vlaneseq
          %v237 = vshrl.u32 %v236, 7
          %v238 = vadd.s32 %v237, 8
          %v239 = vadd.s32 %v237, 16
          %v240 = vadd.s32 %v237, 24
          %v241 = vadd.s32 %v237, 32
          %v242 = vadd.s32 %v237, 40
          %v243 = vadd.s32 %v237, 48
          %v244 = vadd.s32 %v237, 56
          %v245 = vadd.s32 %v237, 64
          %v246 = vadd.s32 %v237, 72
          %v247 = vadd.s32 %v237, 80
          %v248 = vadd.s32 %v237, 88
          %vm249 = vcmp.lt.s32.totalorder %v237, 64
          %vm250 = vcmp.lt.s32.totalorder %v238, 64
          %vm251 = vcmp.lt.s32.totalorder %v239, 64
          %vm252 = vcmp.lt.s32.totalorder %v240, 64
          %vm253 = vcmp.lt.s32.totalorder %v241, 64
          %vm254 = vcmp.lt.s32.totalorder %v242, 64
          %vm255 = vcmp.lt.s32.totalorder %v243, 64
          %vm256 = vcmp.lt.s32.totalorder %v244, 64
          %vm257 = vcmp.lt.s32.totalorder %v245, 64
          %vm258 = vcmp.lt.s32.totalorder %v246, 64
          %vm259 = vcmp.lt.s32.totalorder %v247, 64
          %vm260 = vcmp.lt.s32.totalorder %v248, 64
          %v261 = vsel %vm249, %v224, 0.0
          %v262 = vsel %vm250, %v225, 0.0
          %v263 = vsel %vm251, %v226, 0.0
          %v264 = vsel %vm252, %v227, 0.0
          %v265 = vsel %vm253, %v228, 0.0
          %v266 = vsel %vm254, %v229, 0.0
          %v267 = vsel %vm255, %v230, 0.0
          %v268 = vsel %vm256, %v231, 0.0
          %v269 = vsel %vm257, %v232, 0.0
          %v270 = vsel %vm258, %v233, 0.0
          %v271 = vsel %vm259, %v234, 0.0
          %v272 = vsel %vm260, %v235, 0.0
          %v273 = vld [vmem:[#allocation2] sm:$0xff]
          %v274 = vadd.f32 %v261, %v262
          %v275 = vadd.f32 %v274, %v263
          %v276 = vadd.f32 %v275, %v264
          %v277 = vadd.f32 %v276, %v265
          %v278 = vadd.f32 %v277, %v266
          %v279 = vadd.f32 %v278, %v267
          %v280 = vadd.f32 %v279, %v268
          %v281 = vadd.f32 %v280, %v269
          %v282 = vadd.f32 %v281, %v270
          %v283 = vadd.f32 %v282, %v271
          %v284 = vadd.f32 %v283, %v272
          %v285 = vadd.f32 %v273, %v284
          %286 = vst [vmem:[#allocation2] sm:$0xff] %v285
          %v287 = vld [vmem:[#allocation2] sm:$0xff]
          %v288 = vrot.slane %v287, 4
          %v289 = vadd.f32 %v287, %v288
          %v290 = vrot.slane %v289, 2
          %v291 = vadd.f32 %v289, %v290
          %v292 = vrot.slane %v291, 1
          %v293 = vadd.f32 %v291, %v292
          %294 = vst [vmem:[%s155] sm:$0x1] %v293
        $region40: #{tpu_custom_call.1} parent=23 // pred_fallthru
          _
        %s295 = sand.u32 %s66, 1
        %s296 = scalar_lea.sflag [#allocation5], %s295
        %s297 = sand.u32 %s66, 1
        %s298 = scalar_lea.vmem [#allocation6], %s297
        // Predicated region
        $region41: #{tpu_custom_call.1} parent=23 // pred_check
          %p299 = pneg %p76
        $region42: #{tpu_custom_call.1} parent=23 // pred_check_branch
          %301 = sbr.rel (%p299) target = $region44
        $region43: #{tpu_custom_call.1} parent=23 // pred_region
          %s303 = ssub.s32 16, 16
          %304 = vsyncadd %s296, %s303
          %s305 = smul.addr %s22, 16
          %s306 = scalar_lea.hbm %s1, %s305
          %s308 = sshll.u32 %s298, 4
          %s309 = int_to_ptr.vmem [resolvable:$true] %s308
          %311 = dma.vmem_to_hbm [thread:$0]  %s309, 16, %s306, %s296
        $region44: #{tpu_custom_call.1} parent=23 // pred_fallthru
          _
      $region24: #{tpu_custom_call.1} parent=5 // pred_fallthru
        _
      %p312 = scmp.le.s32.totalorder 2, %s13
      // Predicated region
      $region45: #{tpu_custom_call.1} parent=5 // pred_check
        %p313 = pneg %p312
      $region46: #{tpu_custom_call.1} parent=5 // pred_check_branch
        %315 = sbr.rel (%p313) target = $region48
      $region47: #{tpu_custom_call.1} parent=5 // pred_region
        %s316 = ssub.s32 %s13, 2
        // Predicated region
        $region49: #{tpu_custom_call.1} parent=47 // pred_check
          %p317 = pneg %p82
        $region50: #{tpu_custom_call.1} parent=47 // pred_check_branch
          %319 = sbr.rel (%p317) target = $region52
        $region51: #{tpu_custom_call.1} parent=47 // pred_region
          %s320 = sand.u32 %s67, 1
          %s321 = scalar_lea.sflag [#allocation5], %s320
          %s322 = sand.u32 %s67, 1
          %s323 = scalar_lea.vmem [#allocation6], %s322
          %324 = dma.done %s321, 16
        $region52: #{tpu_custom_call.1} parent=47 // pred_fallthru
          _
      $region48: #{tpu_custom_call.1} parent=5 // pred_fallthru
        _
    $region6: #{tpu_custom_call.1} parent=1 // loop_footer
      %s17 = sadd.s32 1, %s13
    $region7: #{tpu_custom_call.1} parent=1 // loop_footer_branch
      %12 = sbr.rel target = $region3
    $region8: #{tpu_custom_call.1} parent=1 // loop_exit
      _
    %325 = vsyncpa [#allocation4], 1
    %s326 = scalar_lea.sflag [#allocation4], 1
    %327 = vsyncpa %s326, 1
    %328 = vsyncpa [#allocation5], 1
    %s329 = scalar_lea.sflag [#allocation5], 1
    %330 = vsyncpa %s329, 1

</llo_original>
